<compile_context>
chip_gen: v5e
topology: v5e:2x2
jax: 0.10.0
libtpu: 0.0.40
codegen_flags: <defaults>
</compile_context>

<pallas_src>
import math

import jax
import jax.numpy as jnp
from jax.experimental import pallas as pl
from jax.experimental.pallas import tpu as pltpu

BN_EPS = 1e-5
TWO_PI = 2.0 * math.pi

VOCAB_SIZES = [12, 7, 24, 5, 3, 8]          # configs['data']['static_context_max']
N_FEAT = len(VOCAB_SIZES) * 2 + 3           # 15
H_ROWS = 16                                 # 15 features padded to 16 rows
OUT_SIZE = 32
LANE = 128
TB_MAX = 8192                               # lane-tile size cap (multiple of 128)

# h-row r -> original feature index:
#   rows 0:3 = sin of cyc feats (orig cols 0,2,4), rows 3:6 = cos (1,3,5),
#   rows 6:12 = embedding-lookup feats, rows 12:15 = linear(z) feats, row 15 = pad.
H_PERM = [0, 2, 4, 1, 3, 5, 6, 7, 8, 9, 10, 11, 12, 13, 14]


def _round_up(a, b):
    return ((a + b - 1) // b) * b


def _encoder_kernel(x_ref, p_ref, w2_ref, o_ref, h_ref):
    """x_ref: (16, TB) input slab  [cyc rows 0:3 | zeros 3:6 | lookups 6:12 |
                                    z rows 12:15 | zero row 15]
       p_ref: (32, 16) packed parameter slab (static column layout, see wrapper)
       w2_ref: (32, 16) bn2-folded, permuted linear2 weight (pad row zeroed)
       o_ref: (32, TB) output
       h_ref: (16, TB) VMEM scratch for the fused activation slab
    """
    slab = x_ref[...]                                    # (16, TB)

    # ---- static parameter slices ----
    a1 = p_ref[0:H_ROWS, 0:1]                            # fused bn1 scale (h-row order)
    c1 = p_ref[0:H_ROWS, 1:2]                            # fused bn1 shift
    off = p_ref[0:3, 2:3]                                # cyclical offsets (month -> x-1)
    scl = p_ref[0:3, 3:4]                                # 2*pi / max_value
    w1c0 = p_ref[0:3, 4:5]                               # W1[:, 0]
    w1c1 = p_ref[0:3, 5:6]                               # W1[:, 1]
    w1c2 = p_ref[0:3, 6:7]                               # W1[:, 2]
    b1 = p_ref[0:3, 7:8]                                 # linear bias
    b2 = p_ref[0:OUT_SIZE, 8:9]                          # bn2-folded linear2 bias (32,1)

    # ---- cyclical embeddings ----
    cyc = slab[0:3, :]                                   # (3, TB)
    ang = (cyc - off) * scl                              # (3, TB)

    # ---- 3x3 z projection on the VPU (no tiny MXU matmul) ----
    z = slab[12:15, :]                                   # (3, TB)
    lin = (w1c0 * z[0:1, :] + w1c1 * z[1:2, :] + w1c2 * z[2:3, :] + b1)  # (3, TB)

    # ---- assemble the 16-row activation slab at static row offsets ----
    h_ref[...] = slab                                    # lookup rows 6:12 + zero rows
    h_ref[0:3, :] = jnp.sin(ang)
    h_ref[3:6, :] = jnp.cos(ang)
    h_ref[12:15, :] = lin

    # ---- fused bn1 + relu (row 15: scale=shift=0 -> stays 0) ----
    h = jnp.maximum(h_ref[...] * a1 + c1, 0.0)           # (16, TB)

    # ---- single MXU matmul: linear2 with bn2 folded into W2/b2 ----
    y = jnp.dot(w2_ref[...], h, preferred_element_type=jnp.float32) + b2  # (32, TB)
    o_ref[...] = jnp.maximum(y, 0.0)


def static_context_forward_pallas(x, z, p):
    """x: (B, 6) int32 categorical features, z: (B, 3) float continuous."""
    f32 = jnp.float32
    B = x.shape[0]

    # ---- JAX glue: data-dependent embedding-table gathers ----
    lk = jnp.concatenate([p['emb_tables'][j][x[:, 3 + j]] for j in range(3)],
                         axis=1).astype(f32)             # (B, 6)
    cyc = x[:, :3].astype(f32)                           # (B, 3)

    # ---- fold eval-mode BatchNorms into affine params / weights ----
    s1 = p['bn1_gamma'] * jax.lax.rsqrt(p['bn1_var'] + BN_EPS)
    c1 = p['bn1_beta'] - p['bn1_mean'] * s1
    s2 = p['bn2_gamma'] * jax.lax.rsqrt(p['bn2_var'] + BN_EPS)
    c2 = p['bn2_beta'] - p['bn2_mean'] * s2

    perm = jnp.array(H_PERM, jnp.int32)
    a16 = jnp.zeros((H_ROWS,), f32).at[:N_FEAT].set(s1[perm])
    c16 = jnp.zeros((H_ROWS,), f32).at[:N_FEAT].set(c1[perm])

    w2f = p['W2'].astype(f32) * s2[:, None]              # (32, 15)  bn2-scaled rows
    w2cat = jnp.zeros((OUT_SIZE, H_ROWS), f32).at[:, :N_FEAT].set(w2f[:, perm])
    b2f = p['b2'].astype(f32) * s2 + c2                  # (32,)

    # ---- one packed parameter slab (static column layout) ----
    pslab = jnp.zeros((OUT_SIZE, 16), f32)
    pslab = pslab.at[:H_ROWS, 0].set(a16)                                    # bn1 scale
    pslab = pslab.at[:H_ROWS, 1].set(c16)                                    # bn1 shift
    pslab = pslab.at[:3, 2].set(jnp.array([1.0, 0.0, 0.0], f32))             # month offset
    pslab = pslab.at[:3, 3].set(jnp.array([TWO_PI / 12.0, TWO_PI / 7.0,
                                           TWO_PI / 24.0], f32))             # 2*pi/max
    pslab = pslab.at[:3, 4].set(p['W1'][:, 0].astype(f32))
    pslab = pslab.at[:3, 5].set(p['W1'][:, 1].astype(f32))
    pslab = pslab.at[:3, 6].set(p['W1'][:, 2].astype(f32))
    pslab = pslab.at[:3, 7].set(p['b1'].astype(f32))
    pslab = pslab.at[:OUT_SIZE, 8].set(b2f)

    # ---- feature-major input slab: batch on the 128-lane axis ----
    feat = jnp.zeros((B, H_ROWS), f32)
    feat = feat.at[:, 0:3].set(cyc)
    feat = feat.at[:, 6:12].set(lk)
    feat = feat.at[:, 12:15].set(z.astype(f32))

    if _round_up(B, LANE) <= TB_MAX:
        tb = _round_up(B, LANE)
    else:
        tb = TB_MAX
    b_pad = _round_up(B, tb)
    slab = jnp.zeros((H_ROWS, b_pad), f32).at[:, :B].set(feat.T)   # (16, b_pad)

    grid = (b_pad // tb,)
    out_t = pl.pallas_call(
        _encoder_kernel,
        out_shape=jax.ShapeDtypeStruct((OUT_SIZE, b_pad), f32),
        grid=grid,
        in_specs=[
            pl.BlockSpec((H_ROWS, tb), lambda i: (0, i)),          # streamed input
            pl.BlockSpec(pslab.shape, lambda i: (0, 0)),           # resident params
            pl.BlockSpec(w2cat.shape, lambda i: (0, 0)),           # resident weight
        ],
        out_specs=pl.BlockSpec((OUT_SIZE, tb), lambda i: (0, i)),  # lane-dense output
        scratch_shapes=[pltpu.VMEM((H_ROWS, tb), f32)],
        compiler_params=pltpu.CompilerParams(
            dimension_semantics=("parallel",)),                    # 2 TCs on v7x
    )(slab, pslab, w2cat)

    # layout plumbing back to the module's (B, 32) batch-major output
    return out_t.T[:B]


def reference_forward(x, z, p):
    """Pure-JAX reference mirroring the PyTorch module (eval mode)."""
    specs = [(12.0, True), (7.0, False), (24.0, False)]
    embs = []
    for i, (mv, month) in enumerate(specs):
        xi = x[:, i].astype(jnp.float32)
        if month:
            xi = xi - 1.0
        a = TWO_PI * xi / mv
        embs.append(jnp.stack([jnp.sin(a), jnp.cos(a)], axis=1))
    for j in range(3):
        embs.append(p['emb_tables'][j][x[:, 3 + j]])
    embedded = jnp.concatenate(embs, axis=1)                             # (B, 12)
    lin = z @ p['W1'].T + p['b1']                                        # (B, 3)
    out = jnp.concatenate([embedded, lin], axis=1)                       # (B, 15)
    out = ((out - p['bn1_mean']) / jnp.sqrt(p['bn1_var'] + BN_EPS)
           * p['bn1_gamma'] + p['bn1_beta'])
    out = jnp.maximum(out, 0.0)
    out = out @ p['W2'].T + p['b2']                                      # (B, 32)
    out = ((out - p['bn2_mean']) / jnp.sqrt(p['bn2_var'] + BN_EPS)
           * p['bn2_gamma'] + p['bn2_beta'])
    out = jnp.maximum(out, 0.0)
    return out


def init_params(key):
    ks = jax.random.split(key, 16)
    p = {
        'W1': 0.5 * jax.random.normal(ks[0], (3, 3), jnp.float32),
        'b1': 0.1 * jax.random.normal(ks[1], (3,), jnp.float32),
        'W2': 0.2 * jax.random.normal(ks[2], (OUT_SIZE, N_FEAT), jnp.float32),
        'b2': 0.1 * jax.random.normal(ks[3], (OUT_SIZE,), jnp.float32),
        'bn1_gamma': 1.0 + 0.1 * jax.random.normal(ks[4], (N_FEAT,), jnp.float32),
        'bn1_beta': 0.1 * jax.random.normal(ks[5], (N_FEAT,), jnp.float32),
        'bn1_mean': 0.1 * jax.random.normal(ks[6], (N_FEAT,), jnp.float32),
        'bn1_var': jax.random.uniform(ks[7], (N_FEAT,), jnp.float32, 0.5, 1.5),
        'bn2_gamma': 1.0 + 0.1 * jax.random.normal(ks[8], (OUT_SIZE,), jnp.float32),
        'bn2_beta': 0.1 * jax.random.normal(ks[9], (OUT_SIZE,), jnp.float32),
        'bn2_mean': 0.1 * jax.random.normal(ks[10], (OUT_SIZE,), jnp.float32),
        'bn2_var': jax.random.uniform(ks[11], (OUT_SIZE,), jnp.float32, 0.5, 1.5),
        'emb_tables': [
            0.3 * jax.random.normal(ks[12 + j], (VOCAB_SIZES[3 + j] + 1, 2),
                                    jnp.float32)
            for j in range(3)
        ],
    }
    return p


if __name__ == "__main__":
    B = 8
    key = jax.random.PRNGKey(0)
    k_par, k_x0, k_x1, k_x2, k_x3, k_z = jax.random.split(key, 6)
    params = init_params(k_par)

    month = jax.random.randint(k_x0, (B, 1), 1, 13, jnp.int32)           # 1..12
    dow = jax.random.randint(k_x1, (B, 1), 0, 7, jnp.int32)              # 0..6
    hour = jax.random.randint(k_x2, (B, 1), 0, 24, jnp.int32)            # 0..23
    cats = jnp.stack(
        [jax.random.randint(jax.random.fold_in(k_x3, j), (B,), 0,
                            VOCAB_SIZES[3 + j] + 1, jnp.int32)
         for j in range(3)], axis=1)                                     # (B, 3)
    x = jnp.concatenate([month, dow, hour, cats], axis=1)                # (B, 6) int32
    z = jax.random.normal(k_z, (B, 3), jnp.float32)                      # (B, 3)

    out = static_context_forward_pallas(x, z, params)
    out = jax.block_until_ready(out)

    ref = reference_forward(x, z, params)
    assert out.shape == (B, OUT_SIZE) and out.dtype == jnp.float32
    assert jnp.allclose(out, ref, rtol=2e-3, atol=2e-3), (
        f"max abs diff {jnp.max(jnp.abs(out - ref))}")

    print("KERNEL_OK")
</pallas_src>

<mosaic_0001>
module attributes {stable_mosaic.version = 11 : i64} {
  func.func @_encoder_kernel(%arg0: i32, %arg1: memref<16x128xf32, #tpu.memory_space<vmem>>, %arg2: memref<32x16xf32, #tpu.memory_space<vmem>>, %arg3: memref<32x16xf32, #tpu.memory_space<vmem>>, %arg4: memref<32x128xf32, #tpu.memory_space<vmem>>, %arg5: memref<16x128xf32, #tpu.memory_space<vmem>>) attributes {dimension_semantics = [#tpu.dimension_semantics<parallel>], iteration_bounds = array<i64: 1>, scalar_prefetch = 0 : i64, scratch_operands = 1 : i64, tpu.core_type = #tpu.core_type<tc>, window_params = [{transform_indices = @transform_0, window_bounds = array<i64: 16, 128>}, {pipeline_mode = #tpu.pipeline_mode<synchronous>, transform_indices = @transform_1, window_bounds = array<i64: 32, 16>}, {pipeline_mode = #tpu.pipeline_mode<synchronous>, transform_indices = @transform_2, window_bounds = array<i64: 32, 16>}, {transform_indices = @transform_3, window_bounds = array<i64: 32, 128>}]} {
    %c0 = arith.constant 0 : index
    %c0_0 = arith.constant 0 : index
    %0 = vector.load %arg1[%c0, %c0_0] : memref<16x128xf32, #tpu.memory_space<vmem>>, vector<16x128xf32>
    %c0_1 = arith.constant 0 : index
    %c0_2 = arith.constant 0 : index
    %1 = vector.load %arg2[%c0_1, %c0_2] : memref<32x16xf32, #tpu.memory_space<vmem>>, vector<16x1xf32>
    %c0_3 = arith.constant 0 : index
    %c1 = arith.constant 1 : index
    %2 = vector.load %arg2[%c0_3, %c1] : memref<32x16xf32, #tpu.memory_space<vmem>>, vector<16x1xf32>
    %c0_4 = arith.constant 0 : index
    %c2 = arith.constant 2 : index
    %3 = vector.load %arg2[%c0_4, %c2] : memref<32x16xf32, #tpu.memory_space<vmem>>, vector<3x1xf32>
    %c0_5 = arith.constant 0 : index
    %c3 = arith.constant 3 : index
    %4 = vector.load %arg2[%c0_5, %c3] : memref<32x16xf32, #tpu.memory_space<vmem>>, vector<3x1xf32>
    %c0_6 = arith.constant 0 : index
    %c4 = arith.constant 4 : index
    %5 = vector.load %arg2[%c0_6, %c4] : memref<32x16xf32, #tpu.memory_space<vmem>>, vector<3x1xf32>
    %c0_7 = arith.constant 0 : index
    %c5 = arith.constant 5 : index
    %6 = vector.load %arg2[%c0_7, %c5] : memref<32x16xf32, #tpu.memory_space<vmem>>, vector<3x1xf32>
    %c0_8 = arith.constant 0 : index
    %c6 = arith.constant 6 : index
    %7 = vector.load %arg2[%c0_8, %c6] : memref<32x16xf32, #tpu.memory_space<vmem>>, vector<3x1xf32>
    %c0_9 = arith.constant 0 : index
    %c7 = arith.constant 7 : index
    %8 = vector.load %arg2[%c0_9, %c7] : memref<32x16xf32, #tpu.memory_space<vmem>>, vector<3x1xf32>
    %c0_10 = arith.constant 0 : index
    %c8 = arith.constant 8 : index
    %9 = vector.load %arg2[%c0_10, %c8] : memref<32x16xf32, #tpu.memory_space<vmem>>, vector<32x1xf32>
    %10 = vector.extract_strided_slice %0 {offsets = [0, 0], sizes = [3, 128], strides = [1, 1]} : vector<16x128xf32> to vector<3x128xf32>
    %11 = vector.broadcast %3 : vector<3x1xf32> to vector<3x128xf32>
    %12 = arith.subf %10, %11 : vector<3x128xf32>
    %13 = vector.broadcast %4 : vector<3x1xf32> to vector<3x128xf32>
    %14 = arith.mulf %12, %13 : vector<3x128xf32>
    %15 = vector.extract_strided_slice %0 {offsets = [12, 0], sizes = [3, 128], strides = [1, 1]} : vector<16x128xf32> to vector<3x128xf32>
    %16 = vector.extract_strided_slice %15 {offsets = [0, 0], sizes = [1, 128], strides = [1, 1]} : vector<3x128xf32> to vector<1x128xf32>
    %17 = vector.broadcast %5 : vector<3x1xf32> to vector<3x128xf32>
    %18 = vector.broadcast %16 : vector<1x128xf32> to vector<3x128xf32>
    %19 = arith.mulf %17, %18 : vector<3x128xf32>
    %20 = vector.extract_strided_slice %15 {offsets = [1, 0], sizes = [1, 128], strides = [1, 1]} : vector<3x128xf32> to vector<1x128xf32>
    %21 = vector.broadcast %6 : vector<3x1xf32> to vector<3x128xf32>
    %22 = vector.broadcast %20 : vector<1x128xf32> to vector<3x128xf32>
    %23 = arith.mulf %21, %22 : vector<3x128xf32>
    %24 = arith.addf %19, %23 : vector<3x128xf32>
    %25 = vector.extract_strided_slice %15 {offsets = [2, 0], sizes = [1, 128], strides = [1, 1]} : vector<3x128xf32> to vector<1x128xf32>
    %26 = vector.broadcast %7 : vector<3x1xf32> to vector<3x128xf32>
    %27 = vector.broadcast %25 : vector<1x128xf32> to vector<3x128xf32>
    %28 = arith.mulf %26, %27 : vector<3x128xf32>
    %29 = arith.addf %24, %28 : vector<3x128xf32>
    %30 = vector.broadcast %8 : vector<3x1xf32> to vector<3x128xf32>
    %31 = arith.addf %29, %30 : vector<3x128xf32>
    %c0_11 = arith.constant 0 : index
    %c0_12 = arith.constant 0 : index
    %32 = vector.load %arg5[%c0_11, %c0_12] : memref<16x128xf32, #tpu.memory_space<vmem>>, vector<16x128xf32>
    tpu.vector_store %arg5[%c0_11, %c0_12], %0 {strides = array<i32>} : memref<16x128xf32, #tpu.memory_space<vmem>>, vector<16x128xf32>,
    %33 = math.sin %14 : vector<3x128xf32>
    %c0_13 = arith.constant 0 : index
    %c0_14 = arith.constant 0 : index
    %34 = vector.load %arg5[%c0_13, %c0_14] : memref<16x128xf32, #tpu.memory_space<vmem>>, vector<3x128xf32>
    tpu.vector_store %arg5[%c0_13, %c0_14], %33 {strides = array<i32>} : memref<16x128xf32, #tpu.memory_space<vmem>>, vector<3x128xf32>,
    %35 = math.cos %14 : vector<3x128xf32>
    %c3_15 = arith.constant 3 : index
    %c0_16 = arith.constant 0 : index
    %36 = vector.load %arg5[%c3_15, %c0_16] : memref<16x128xf32, #tpu.memory_space<vmem>>, vector<3x128xf32>
    tpu.vector_store %arg5[%c3_15, %c0_16], %35 {strides = array<i32>} : memref<16x128xf32, #tpu.memory_space<vmem>>, vector<3x128xf32>,
    %c12 = arith.constant 12 : index
    %c0_17 = arith.constant 0 : index
    %37 = vector.load %arg5[%c12, %c0_17] : memref<16x128xf32, #tpu.memory_space<vmem>>, vector<3x128xf32>
    tpu.vector_store %arg5[%c12, %c0_17], %31 {strides = array<i32>} : memref<16x128xf32, #tpu.memory_space<vmem>>, vector<3x128xf32>,
    %c0_18 = arith.constant 0 : index
    %c0_19 = arith.constant 0 : index
    %38 = vector.load %arg5[%c0_18, %c0_19] : memref<16x128xf32, #tpu.memory_space<vmem>>, vector<16x128xf32>
    %39 = vector.broadcast %1 : vector<16x1xf32> to vector<16x128xf32>
    %40 = arith.mulf %38, %39 : vector<16x128xf32>
    %41 = vector.broadcast %2 : vector<16x1xf32> to vector<16x128xf32>
    %42 = arith.addf %40, %41 : vector<16x128xf32>
    %cst = arith.constant 0.000000e+00 : f32
    %43 = vector.broadcast %cst : f32 to vector<16x128xf32>
    %44 = arith.maximumf %42, %43 : vector<16x128xf32>
    %c0_20 = arith.constant 0 : index
    %c0_21 = arith.constant 0 : index
    %45 = vector.load %arg3[%c0_20, %c0_21] : memref<32x16xf32, #tpu.memory_space<vmem>>, vector<32x16xf32>
    %cst_22 = arith.constant dense<0.000000e+00> : vector<32x128xf32>
    %46 = tpu.matmul %45, %44, %cst_22 {dimension_numbers = #tpu.dot_dimension_numbers<[1], [0], [0], [1], [0, 0, 1, 1], [], []>} : vector<32x16xf32>, vector<16x128xf32>, vector<32x128xf32> -> vector<32x128xf32>
    %47 = vector.broadcast %9 : vector<32x1xf32> to vector<32x128xf32>
    %48 = arith.addf %46, %47 : vector<32x128xf32>
    %cst_23 = arith.constant 0.000000e+00 : f32
    %49 = vector.broadcast %cst_23 : f32 to vector<32x128xf32>
    %50 = arith.maximumf %48, %49 : vector<32x128xf32>
    %c0_24 = arith.constant 0 : index
    %c0_25 = arith.constant 0 : index
    %51 = vector.load %arg4[%c0_24, %c0_25] : memref<32x128xf32, #tpu.memory_space<vmem>>, vector<32x128xf32>
    tpu.vector_store %arg4[%c0_24, %c0_25], %50 {strides = array<i32>} : memref<32x128xf32, #tpu.memory_space<vmem>>, vector<32x128xf32>,
    return
  }
  func.func @transform_0(%arg0: i32) -> (i32, i32) {
    %c0_i32 = arith.constant 0 : i32
    %c0_i32_0 = arith.constant 0 : i32
    return %c0_i32, %arg0 : i32, i32
  }
  func.func @transform_1(%arg0: i32) -> (i32, i32) {
    %c0_i32 = arith.constant 0 : i32
    %c0_i32_0 = arith.constant 0 : i32
    %c0_i32_1 = arith.constant 0 : i32
    return %c0_i32, %c0_i32_0 : i32, i32
  }
  func.func @transform_2(%arg0: i32) -> (i32, i32) {
    %c0_i32 = arith.constant 0 : i32
    %c0_i32_0 = arith.constant 0 : i32
    %c0_i32_1 = arith.constant 0 : i32
    return %c0_i32, %c0_i32_0 : i32, i32
  }
  func.func @transform_3(%arg0: i32) -> (i32, i32) {
    %c0_i32 = arith.constant 0 : i32
    %c0_i32_0 = arith.constant 0 : i32
    return %c0_i32, %arg0 : i32, i32
  }
}

</mosaic_0001>

<llo_original>
// kernel: tpu_custom_call.1
$region0: #{tpu_custom_call.1}
  #allocation0 [shape = 'u32[]', space=smem, size = 0x4, offset = 0x4, fixed_abs, tag = 'smem constant byte address 0x4 - core index']
  #allocation1 [shape = 'u32[72,128]{1,0:T(1,128)}', space=vmem, size = 0x9000, scoped, tag = 'internal scratch']
  #allocation2 [shape = 'f32[16,128]{1,0:T(8,128)}', space=vmem, size = 0x2000, scoped, tag = 'scratch operand']
  %s0 = inlined_call_operand.vmem [shape: f32[16,128], index: 0, kind: input, shape index: {}]
  %s1 = inlined_call_operand.vmem [shape: f32[32,16], index: 1, kind: input, shape index: {}]
  %s2 = inlined_call_operand.vmem [shape: f32[32,16], index: 2, kind: input, shape index: {}]
  %s3 = inlined_call_operand.hbm [shape: f32[32,128], index: 3, kind: output, shape index: {}]
  %s4 = sld [smem:[#allocation0]]
  $region22: #{tpu_custom_call.1} parent=0
    _
  %s6 = ssub.s32 1, %s4
  %s7 = scalar_select 0, %s6, %s4
  $region1: #{tpu_custom_call.1} parent=0
    #allocation3 [shape = 'u8[16384]{0}', space=vmem, size = 0x4000, scoped, tag = 'output window, operand 0, single buffered']
    #allocation4 [shape = 's32[1]{0}', space=sflag, size = 0x4, scoped, tag = 'scoped memory for tpu_custom_call.1']
    %8 = vsyncpa [#allocation4], 0
    // Predicated region
    $region2: #{tpu_custom_call.1} parent=1 // pred_check
      _
    $region3: #{tpu_custom_call.1} parent=1 // pred_check_branch
      %10 = sbr.rel (0) target = $region5
    $region4: #{tpu_custom_call.1} parent=1 // pred_region
      _
    $region5: #{tpu_custom_call.1} parent=1 // pred_fallthru
      _
    // Predicated region
    $region6: #{tpu_custom_call.1} parent=1 // pred_check
      _
    $region7: #{tpu_custom_call.1} parent=1 // pred_check_branch
      %12 = sbr.rel (0) target = $region9
    $region8: #{tpu_custom_call.1} parent=1 // pred_region
      _
    $region9: #{tpu_custom_call.1} parent=1 // pred_fallthru
      _
    // Predicated region
    $region10: #{tpu_custom_call.1} parent=1 // pred_check
      _
    $region11: #{tpu_custom_call.1} parent=1 // pred_check_branch
      %14 = sbr.rel (0) target = $region13
    $region12: #{tpu_custom_call.1} parent=1 // pred_region
      _
    $region13: #{tpu_custom_call.1} parent=1 // pred_fallthru
      _
    %v15 = vld [vmem:[%s0] sm:$0xff]
    %v16 = vld [vmem:[%s0 + $0x8] sm:$0xff]
    %v17 = vld [vmem:[%s1] sm:$0xff]
    %v18 = vld [vmem:[%s1 + $0x8] sm:$0xff]
    %v19 = vld [vmem:[%s1] sm:$0x7]
    %v20 = vld [vmem:[%s1 + $0x10] sm:$0xff]
    %v21 = vld [vmem:[%s1 + $0x18] sm:$0xff]
    %23 = vset.pattern.permute.xlu0 2
    %24 = vperm.xlu0 %23, %v19
    %v25 = vpop.permute.xlu0 %24
    %v27 = vsub.f32 %v15, %v25
    %28 = vset.pattern.permute.xlu0 3
    %29 = vperm.xlu0 %28, %v19
    %v30 = vpop.permute.xlu0 %29
    %v32 = vmul.f32 %v27, %v30
    %33 = vset.pattern.permute.xlu0 4
    %34 = vperm.xlu0 %33, %v19
    %v35 = vpop.permute.xlu0 %34
    %v37 = vperm.slane %v16, 4
    %v38 = vmul.f32 %v35, %v37
    %39 = vset.pattern.permute.xlu0 5
    %40 = vperm.xlu0 %39, %v19
    %v41 = vpop.permute.xlu0 %40
    %v43 = vperm.slane %v16, 5
    %v44 = vmul.f32 %v41, %v43
    %v45 = vadd.f32 %v38, %v44
    %46 = vset.pattern.permute.xlu0 6
    %47 = vperm.xlu0 %46, %v19
    %v48 = vpop.permute.xlu0 %47
    %v50 = vperm.slane %v16, 6
    %v51 = vmul.f32 %v48, %v50
    %v52 = vadd.f32 %v45, %v51
    %53 = vset.pattern.permute.xlu0 7
    %54 = vperm.xlu0 %53, %v19
    %v55 = vpop.permute.xlu0 %54
    %v57 = vadd.f32 %v52, %v55
    %58 = vst [vmem:[#allocation2] sm:$0xff] %v15
    %59 = vst [vmem:[#allocation2 + $0x8] sm:$0xff] %v16
    %v60 = vand.u32 2147483647, %v32
    %vm61 = vcmp.le.f32.partialorder %v60, 0.7853982
    %vm62 = vcmp.lt.s32.totalorder %v32, 0
    %v63 = vand.u32 %v32, 2139095040
    %v64 = vshrl.u32 %v63, 23
    %v65 = vsub.s32 %v64, 127
    %v66 = vand.u32 2147483647, %v32
    %v67 = vand.u32 %v66, 8388607
    %v68 = vor.u32 %v67, 8388608
    %v69 = vsub.s32 0, %v68
    %v70 = vadd.s32 %v65, 1
    %vm71 = vcmp.gt.s32.totalorder %v70, 0
    %v72 = vsel %vm71, %v70, 0
    %v73 = vshrl.u32 %v72, 5
    %v74 = vand.u32 %v72, 31
    %v75 = vsub.s32 32, %v74
    %v76 = vshrl.u32 683565275, %v75
    %v77 = vshll.u32 683565275, %v74
    %v78 = vshrl.u32 2475754826, %v75
    %v79 = vor.u32 %v77, %v78
    %v80 = vshll.u32 2475754826, %v74
    %v81 = vshrl.u32 2131351028, %v75
    %v82 = vor.u32 %v80, %v81
    %v83 = vshll.u32 2131351028, %v74
    %v84 = vshrl.u32 2102212464, %v75
    %v85 = vor.u32 %v83, %v84
    %v86 = vshll.u32 2102212464, %v74
    %v87 = vshrl.u32 920167782, %v75
    %v88 = vor.u32 %v86, %v87
    %v89 = vshll.u32 920167782, %v74
    %v90 = vshrl.u32 1326507024, %v75
    %v91 = vor.u32 %v89, %v90
    %vm92 = vcmp.lt.s32.totalorder %v73, 1
    %vm93 = vcmp.lt.s32.totalorder %v73, 2
    %vm94 = vcmp.lt.s32.totalorder %v73, 3
    %vm95 = vcmp.lt.s32.totalorder %v73, 4
    %v96 = vsel %vm92, %v76, %v79
    %v97 = vsel %vm95, %v85, 2102212464
    %v98 = vsel %vm94, %v82, %v97
    %v99 = vsel %vm93, %v96, %v98
    %v100 = vsel %vm92, %v79, %v82
    %v101 = vsel %vm95, %v88, 920167782
    %v102 = vsel %vm94, %v85, %v101
    %v103 = vsel %vm93, %v100, %v102
    %v104 = vsel %vm92, %v82, %v85
    %v105 = vsel %vm95, %v91, 1326507024
    %v106 = vsel %vm94, %v88, %v105
    %v107 = vsel %vm93, %v104, %v106
    %v108 = vshll.u32 %v68, 8
    %v109 = vand.u32 %v108, 65535
    %v110 = vshrl.u32 %v108, 16
    %v111 = vand.u32 %v107, 65535
    %v112 = vshrl.u32 %v107, 16
    %v113 = vmul.u32 %v109, %v111
    %v114 = vmul.u32 %v109, %v112
    %v115 = vmul.u32 %v110, %v111
    %v116 = vmul.u32 %v110, %v112
    %v117 = vshll.u32 %v114, 16
    %v118 = vshrl.u32 %v114, 16
    %v119 = vshll.u32 %v115, 16
    %v120 = vshrl.u32 %v115, 16
    %vm121 = vc.u32 %v113, %v117
    %v122 = vsel %vm121, 1, 0
    %v123 = vadd.s32 %v113, %v117
    %v124 = vadd.s32 %v116, %v122
    %vm125 = vc.u32 %v123, %v119
    %v126 = vsel %vm125, 1, 0
    %v127 = vadd.s32 %v123, %v119
    %v128 = vadd.s32 %v124, %v126
    %v129 = vadd.s32 %v128, %v118
    %v130 = vadd.s32 %v129, %v120
    %v131 = vand.u32 %v108, 65535
    %v132 = vshrl.u32 %v108, 16
    %v133 = vand.u32 %v103, 65535
    %v134 = vshrl.u32 %v103, 16
    %v135 = vmul.u32 %v131, %v133
    %v136 = vmul.u32 %v131, %v134
    %v137 = vmul.u32 %v132, %v133
    %v138 = vmul.u32 %v132, %v134
    %v139 = vshll.u32 %v136, 16
    %v140 = vshrl.u32 %v136, 16
    %v141 = vshll.u32 %v137, 16
    %v142 = vshrl.u32 %v137, 16
    %vm143 = vc.u32 %v135, %v139
    %v144 = vsel %vm143, 1, 0
    %v145 = vadd.s32 %v135, %v139
    %v146 = vadd.s32 %v138, %v144
    %vm147 = vc.u32 %v145, %v141
    %v148 = vsel %vm147, 1, 0
    %v149 = vadd.s32 %v145, %v141
    %v150 = vadd.s32 %v146, %v148
    %v151 = vadd.s32 %v150, %v140
    %v152 = vadd.s32 %v151, %v142
    %v153 = vmul.u32 %v108, %v99
    %v154 = vadd.s32 %v130, %v149
    %vm155 = vc.u32 %v130, %v149
    %v156 = vadd.s32 %v152, 1
    %v157 = vsel %vm155, %v156, %v152
    %v158 = vadd.s32 %v153, %v157
    %v159 = vadd.s32 %v158, 536870912
    %v160 = vshrl.u32 %v159, 30
    %v161 = vshll.u32 %v160, 30
    %v162 = vsub.s32 %v158, %v161
    %vm163 = vcmp.lt.s32.totalorder %v162, 0
    %v164 = vsub.s32 0, %v162
    %v165 = vsel %vm163, %v164, %v162
    %v166 = vclz %v165
    %v167 = vsub.s32 %v166, 2
    %vm168 = vcmp.gt.s32.totalorder 0, %v167
    %v169 = vsel %vm168, 0, %v167
    %v170 = vsub.s32 32, %v169
    %v171 = vshll.u32 %v162, %v169
    %v172 = vshrl.u32 %v154, %v170
    %v173 = vor.u32 %v171, %v172
    %v174 = vsub.s32 4294967266, %v169
    %v175 = vadd.s32 %v174, 127
    %v176 = vshll.u32 %v175, 23
    %v177 = vor.u32 4788187, %v176
    %v178 = vand.u32 2147483647, %v177
    %v180 = vcvt.s32.f32 %v173
    %v181 = vmul.f32 %v180, %v178
    %v182 = vxor.u32 %v181, 2147483648
    %v183 = vsel %vm62, %v182, %v181
    %v184 = vsub.s32 4, %v160
    %v185 = vsel %vm62, %v184, %v160
    %v186 = vsel %vm61, %v32, %v183
    %v187 = vsel %vm61, 0, %v185
    %v188 = vmul.f32 %v186, %v186
    %v189 = vmul.f32 %v188, -0.001358992
    %v190 = vadd.f32 %v189, 0.041655596
    %v191 = vmul.f32 %v188, %v190
    %v192 = vadd.f32 %v191, -0.4999988
    %v193 = vmul.f32 %v188, %v192
    %v194 = vadd.f32 1.0, %v193
    %v195 = vmul.f32 %v186, %v186
    %v196 = vmul.f32 %v195, -0.00019511016
    %v197 = vadd.f32 %v196, 0.008332121
    %v198 = vmul.f32 %v195, %v197
    %v199 = vadd.f32 %v198, -0.16666654
    %v200 = vmul.f32 %v195, %v199
    %v201 = vadd.f32 %v200, 1.0
    %v202 = vmul.f32 %v201, %v186
    %vm203 = vweird.f32 %v32
    %v204 = vadd.s32 %v187, 3
    %v205 = vand.u32 %v204, 3
    %vm206 = vcmp.lt.s32.totalorder %v205, 2
    %vm207 = vcmp.eq.s32.totalorder %v205, 0
    %v208 = vxor.u32 %v202, 2147483648
    %v209 = vsel %vm207, %v194, %v208
    %vm210 = vcmp.eq.s32.totalorder %v205, 2
    %v211 = vxor.u32 %v194, 2147483648
    %v212 = vsel %vm210, %v211, %v202
    %v213 = vsel %vm206, %v209, %v212
    %v214 = vsel %vm203, nan, %v213
    %215 = vst [vmem:[#allocation2] sm:$0x7] %v214
    %v216 = vand.u32 2147483647, %v32
    %vm217 = vcmp.le.f32.partialorder %v216, 0.7853982
    %vm218 = vcmp.lt.s32.totalorder %v32, 0
    %v219 = vand.u32 %v32, 2139095040
    %v220 = vshrl.u32 %v219, 23
    %v221 = vsub.s32 %v220, 127
    %v222 = vand.u32 2147483647, %v32
    %v223 = vand.u32 %v222, 8388607
    %v224 = vor.u32 %v223, 8388608
    %v225 = vsub.s32 0, %v224
    %v226 = vadd.s32 %v221, 1
    %vm227 = vcmp.gt.s32.totalorder %v226, 0
    %v228 = vsel %vm227, %v226, 0
    %v229 = vshrl.u32 %v228, 5
    %v230 = vand.u32 %v228, 31
    %v231 = vsub.s32 32, %v230
    %v232 = vshrl.u32 683565275, %v231
    %v233 = vshll.u32 683565275, %v230
    %v234 = vshrl.u32 2475754826, %v231
    %v235 = vor.u32 %v233, %v234
    %v236 = vshll.u32 2475754826, %v230
    %v237 = vshrl.u32 2131351028, %v231
    %v238 = vor.u32 %v236, %v237
    %v239 = vshll.u32 2131351028, %v230
    %v240 = vshrl.u32 2102212464, %v231
    %v241 = vor.u32 %v239, %v240
    %v242 = vshll.u32 2102212464, %v230
    %v243 = vshrl.u32 920167782, %v231
    %v244 = vor.u32 %v242, %v243
    %v245 = vshll.u32 920167782, %v230
    %v246 = vshrl.u32 1326507024, %v231
    %v247 = vor.u32 %v245, %v246
    %vm248 = vcmp.lt.s32.totalorder %v229, 1
    %vm249 = vcmp.lt.s32.totalorder %v229, 2
    %vm250 = vcmp.lt.s32.totalorder %v229, 3
    %vm251 = vcmp.lt.s32.totalorder %v229, 4
    %v252 = vsel %vm248, %v232, %v235
    %v253 = vsel %vm251, %v241, 2102212464
    %v254 = vsel %vm250, %v238, %v253
    %v255 = vsel %vm249, %v252, %v254
    %v256 = vsel %vm248, %v235, %v238
    %v257 = vsel %vm251, %v244, 920167782
    %v258 = vsel %vm250, %v241, %v257
    %v259 = vsel %vm249, %v256, %v258
    %v260 = vsel %vm248, %v238, %v241
    %v261 = vsel %vm251, %v247, 1326507024
    %v262 = vsel %vm250, %v244, %v261
    %v263 = vsel %vm249, %v260, %v262
    %v264 = vshll.u32 %v224, 8
    %v265 = vand.u32 %v264, 65535
    %v266 = vshrl.u32 %v264, 16
    %v267 = vand.u32 %v263, 65535
    %v268 = vshrl.u32 %v263, 16
    %v269 = vmul.u32 %v265, %v267
    %v270 = vmul.u32 %v265, %v268
    %v271 = vmul.u32 %v266, %v267
    %v272 = vmul.u32 %v266, %v268
    %v273 = vshll.u32 %v270, 16
    %v274 = vshrl.u32 %v270, 16
    %v275 = vshll.u32 %v271, 16
    %v276 = vshrl.u32 %v271, 16
    %vm277 = vc.u32 %v269, %v273
    %v278 = vsel %vm277, 1, 0
    %v279 = vadd.s32 %v269, %v273
    %v280 = vadd.s32 %v272, %v278
    %vm281 = vc.u32 %v279, %v275
    %v282 = vsel %vm281, 1, 0
    %v283 = vadd.s32 %v279, %v275
    %v284 = vadd.s32 %v280, %v282
    %v285 = vadd.s32 %v284, %v274
    %v286 = vadd.s32 %v285, %v276
    %v287 = vand.u32 %v264, 65535
    %v288 = vshrl.u32 %v264, 16
    %v289 = vand.u32 %v259, 65535
    %v290 = vshrl.u32 %v259, 16
    %v291 = vmul.u32 %v287, %v289
    %v292 = vmul.u32 %v287, %v290
    %v293 = vmul.u32 %v288, %v289
    %v294 = vmul.u32 %v288, %v290
    %v295 = vshll.u32 %v292, 16
    %v296 = vshrl.u32 %v292, 16
    %v297 = vshll.u32 %v293, 16
    %v298 = vshrl.u32 %v293, 16
    %vm299 = vc.u32 %v291, %v295
    %v300 = vsel %vm299, 1, 0
    %v301 = vadd.s32 %v291, %v295
    %v302 = vadd.s32 %v294, %v300
    %vm303 = vc.u32 %v301, %v297
    %v304 = vsel %vm303, 1, 0
    %v305 = vadd.s32 %v301, %v297
    %v306 = vadd.s32 %v302, %v304
    %v307 = vadd.s32 %v306, %v296
    %v308 = vadd.s32 %v307, %v298
    %v309 = vmul.u32 %v264, %v255
    %v310 = vadd.s32 %v286, %v305
    %vm311 = vc.u32 %v286, %v305
    %v312 = vadd.s32 %v308, 1
    %v313 = vsel %vm311, %v312, %v308
    %v314 = vadd.s32 %v309, %v313
    %v315 = vadd.s32 %v314, 536870912
    %v316 = vshrl.u32 %v315, 30
    %v317 = vshll.u32 %v316, 30
    %v318 = vsub.s32 %v314, %v317
    %vm319 = vcmp.lt.s32.totalorder %v318, 0
    %v320 = vsub.s32 0, %v318
    %v321 = vsel %vm319, %v320, %v318
    %v322 = vclz %v321
    %v323 = vsub.s32 %v322, 2
    %vm324 = vcmp.gt.s32.totalorder 0, %v323
    %v325 = vsel %vm324, 0, %v323
    %v326 = vsub.s32 32, %v325
    %v327 = vshll.u32 %v318, %v325
    %v328 = vshrl.u32 %v310, %v326
    %v329 = vor.u32 %v327, %v328
    %v330 = vsub.s32 4294967266, %v325
    %v331 = vadd.s32 %v330, 127
    %v332 = vshll.u32 %v331, 23
    %v333 = vor.u32 4788187, %v332
    %v334 = vand.u32 2147483647, %v333
    %v336 = vcvt.s32.f32 %v329
    %v337 = vmul.f32 %v336, %v334
    %v338 = vxor.u32 %v337, 2147483648
    %v339 = vsel %vm218, %v338, %v337
    %v340 = vsub.s32 4, %v316
    %v341 = vsel %vm218, %v340, %v316
    %v342 = vsel %vm217, %v32, %v339
    %v343 = vsel %vm217, 0, %v341
    %v344 = vmul.f32 %v342, %v342
    %v345 = vmul.f32 %v344, -0.001358992
    %v346 = vadd.f32 %v345, 0.041655596
    %v347 = vmul.f32 %v344, %v346
    %v348 = vadd.f32 %v347, -0.4999988
    %v349 = vmul.f32 %v344, %v348
    %v350 = vadd.f32 1.0, %v349
    %v351 = vmul.f32 %v342, %v342
    %v352 = vmul.f32 %v351, -0.00019511016
    %v353 = vadd.f32 %v352, 0.008332121
    %v354 = vmul.f32 %v351, %v353
    %v355 = vadd.f32 %v354, -0.16666654
    %v356 = vmul.f32 %v351, %v355
    %v357 = vadd.f32 %v356, 1.0
    %v358 = vmul.f32 %v357, %v342
    %vm359 = vweird.f32 %v32
    %v360 = vand.u32 %v343, 3
    %vm361 = vcmp.lt.s32.totalorder %v360, 2
    %vm362 = vcmp.eq.s32.totalorder %v360, 0
    %v363 = vxor.u32 %v358, 2147483648
    %v364 = vsel %vm362, %v350, %v363
    %vm365 = vcmp.eq.s32.totalorder %v360, 2
    %v366 = vxor.u32 %v350, 2147483648
    %v367 = vsel %vm365, %v366, %v358
    %v368 = vsel %vm361, %v364, %v367
    %v369 = vsel %vm359, nan, %v368
    %370 = vst [vmem:[#allocation2 + $0x3] sm:$0x7] %v369
    %371 = vst [vmem:[#allocation2 + $0xc] sm:$0x7] %v57
    %v372 = vld [vmem:[#allocation2] sm:$0xff]
    %v373 = vld [vmem:[#allocation2 + $0x8] sm:$0xff]
    %375 = vset.pattern.permute.xlu0 0
    %376 = vperm.xlu0 %375, %v17
    %v377 = vpop.permute.xlu0 %376
    %380 = vset.pattern.permute.xlu0 0
    %381 = vperm.xlu0 %380, %v18
    %v382 = vpop.permute.xlu0 %381
    %v384 = vmul.f32 %v372, %v377
    %v385 = vmul.f32 %v373, %v382
    %386 = vset.pattern.permute.xlu0 1
    %387 = vperm.xlu0 %386, %v17
    %v388 = vpop.permute.xlu0 %387
    %390 = vset.pattern.permute.xlu0 1
    %391 = vperm.xlu0 %390, %v18
    %v392 = vpop.permute.xlu0 %391
    %v394 = vadd.f32 %v384, %v388
    %v395 = vadd.f32 %v385, %v392
    %v396 = vmax.f32 %v394, 0.0
    %v397 = vmax.f32 %v395, 0.0
    %v398 = vld [vmem:[%s2] sm:$0xff]
    %v399 = vld [vmem:[%s2 + $0x8] sm:$0xff]
    %v400 = vld [vmem:[%s2 + $0x10] sm:$0xff]
    %v401 = vld [vmem:[%s2 + $0x18] sm:$0xff]
    %402 = vset.pattern.permute.xlu0 8
    %403 = vperm.xlu0 %402, %v17
    %v404 = vpop.permute.xlu0 %403
    %406 = vset.pattern.permute.xlu0 8
    %407 = vperm.xlu0 %406, %v18
    %v408 = vpop.permute.xlu0 %407
    %411 = vset.pattern.permute.xlu0 8
    %412 = vperm.xlu0 %411, %v20
    %v413 = vpop.permute.xlu0 %412
    %416 = vset.pattern.permute.xlu0 8
    %417 = vperm.xlu0 %416, %v21
    %v418 = vpop.permute.xlu0 %417
    %vm420 = vcmask 130048
    %v422 = vsel %vm420, %v398, 0
    %v425 = vsel %vm420, %v399, 0
    %v428 = vsel %vm420, %v400, 0
    %v431 = vsel %vm420, %v401, 0
    %433 = vmatpush.msra.mxu0 0.0
    %434 = vmatpush.msra.mxu0 0.0
    %435 = vmatpush.msra.mxu0 0.0
    %436 = vmatpush.msra.mxu0 0.0
    %437 = vmatpush.msra.mxu0 0.0
    %438 = vmatpush.msra.mxu0 0.0
    %439 = vmatpush.msra.mxu0 0.0
    %440 = vmatpush.msra.mxu0 0.0
    %441 = vmatpush.msra.mxu0 0.0
    %442 = vmatpush.msra.mxu0 0.0
    %443 = vmatpush.msra.mxu0 0.0
    %444 = vmatpush.msra.mxu0 0.0
    %445 = vmatpush.msra.mxu0 0.0
    %446 = vmatpush.msra.mxu0 0.0
    %447 = vmatpush.msra.mxu0 %v397
    %448 = vmatpush.msra.mxu0 %v396
    %449 = vmatmul.f32.gmra.mxu0 %v422
    %v450 = vpop.f32.mrf.mxu0
    %v451 = vadd.f32 %v404, %v450
    %452 = vmatmul.f32.gmra.mxu0 %v425
    %v453 = vpop.f32.mrf.mxu0
    %v454 = vadd.f32 %v408, %v453
    %455 = vmatmul.f32.gmra.mxu0 %v428
    %v456 = vpop.f32.mrf.mxu0
    %v457 = vadd.f32 %v413, %v456
    %458 = vmatmul.f32.gmra.mxu0 %v431
    %v459 = vpop.f32.mrf.mxu0
    %v460 = vadd.f32 %v418, %v459
    %461 = vdwg.mxu0
    %v462 = vmax.f32 %v451, 0.0
    %v463 = vmax.f32 %v454, 0.0
    %v464 = vmax.f32 %v457, 0.0
    %v465 = vmax.f32 %v460, 0.0
    %466 = vst [vmem:[#allocation3] sm:$0xff] %v462
    %467 = vst [vmem:[#allocation3 + $0x8] sm:$0xff] %v463
    %468 = vst [vmem:[#allocation3 + $0x10] sm:$0xff] %v464
    %469 = vst [vmem:[#allocation3 + $0x18] sm:$0xff] %v465
    // Predicated region
    $region14: #{tpu_custom_call.1} parent=1 // pred_check
      _
    $region15: #{tpu_custom_call.1} parent=1 // pred_check_branch
      %471 = sbr.rel (0) target = $region17
    $region16: #{tpu_custom_call.1} parent=1 // pred_region
      %473 = vsyncadd [#allocation4], 0
      %s474 = sshll.u32 [#allocation3], 4
      %s475 = int_to_ptr.vmem [resolvable:$true] %s474
      %s476 = sshll.u32 %s3, 4
      %s477 = int_to_ptr.hbm [resolvable:$true] %s476
      %482 = dma.vmem_to_hbm [thread:$0]  %s475, 512, %s477, [#allocation4], 128, 128, 8
    $region17: #{tpu_custom_call.1} parent=1 // pred_fallthru
      _
    // Predicated region
    $region18: #{tpu_custom_call.1} parent=1 // pred_check
      _
    $region19: #{tpu_custom_call.1} parent=1 // pred_check_branch
      %484 = sbr.rel (0) target = $region21
    $region20: #{tpu_custom_call.1} parent=1 // pred_region
      %486 = dma.done [#allocation4], 512
    $region21: #{tpu_custom_call.1} parent=1 // pred_fallthru
      _
    %487 = vsyncpa [#allocation4], 1

</llo_original>
